<compile_context>
chip_gen: v7x
topology: tpu7x:2x2x1
jax: 0.10.0
libtpu: 0.0.40
codegen_flags: <defaults>
</compile_context>

<pallas_src>
import functools

import jax
import jax.numpy as jnp
from jax.experimental import pallas as pl
from jax.experimental.pallas import tpu as pltpu


def _ce_label_smooth_kernel(logits_ref, targets_ref, partial_ref, *,
                            epsilon, num_classes, batch_size):
    i = pl.program_id(0)
    x = logits_ref[...].astype(jnp.float32)                          # (TB, K)
    tb, k = x.shape

    # Numerically stable log-sum-exp (row-wise, classes on the lane axis).
    m = jnp.max(x, axis=1, keepdims=True)                            # (TB, 1) XLU
    lse = jnp.log(jnp.sum(jnp.exp(x - m), axis=1, keepdims=True))    # (TB, 1) EUP+XLU

    # Fused smoothed-weight reduction.  class_ids is a (1, K) iota broadcast
    # against the (TB, 1) targets in the compare — no full-tile int32 iota.
    t = targets_ref[...]                                             # (TB, 1) int32
    class_ids = jax.lax.broadcasted_iota(jnp.int32, (1, k), 1)       # (1, K)
    base_w = epsilon / num_classes
    w = jnp.where(class_ids == t, base_w + (1.0 - epsilon), base_w)  # (TB, K)
    wsum = jnp.sum(w * x, axis=1, keepdims=True)                     # (TB, 1) XLU

    # loss_r = m_r + lse_r - sum_j w_j * x_rj   (weights sum to 1)
    row_loss = m + lse - wsum                                        # (TB, 1)

    # Mask rows past the end of the batch (trailing partial tile).  NOTE: keep
    # this a select (jnp.where), NOT multiply-by-zero — out-of-range rows hold
    # uninitialized VMEM whose exp/log may be NaN/Inf, and arithmetic masking
    # would propagate it into the partial sum.  Lane-wise select does not.
    row_ids = i * tb + jax.lax.broadcasted_iota(jnp.int32, (tb, 1), 0)
    row_loss = jnp.where(row_ids < batch_size, row_loss, 0.0)

    partial_ref[0, 0] = jnp.sum(row_loss)


def _pick_tile_b(batch, num_classes, itemsize):
    # Target ~4 MiB of logits per tile: large enough that the ~0.35 us
    # per-grid-step overhead is amortized (>=85% of HBM roofline on v6e, and
    # proportionally more important on v7x's 3.2 TB/s), small enough that the
    # double-buffered input DMAs + ~3 f32 (TB, K) temporaries stay well inside
    # a 48 MiB scoped-VMEM budget even on v7x (64 MiB physical).
    rows = (4 * 1024 * 1024) // max(1, num_classes * itemsize)
    rows = max(8, min(8192, (rows // 8) * 8))
    # No point in a tile bigger than the whole (sublane-rounded) batch; the
    # trailing partial tile's extra rows are masked inside the kernel.
    batch_rounded = ((batch + 7) // 8) * 8
    rows = min(rows, batch_rounded)
    # A 1-step grid serializes onto a single TensorCore and idles half a v7x
    # chip; split into >= 2 tiles whenever the batch allows it.
    if batch > 8 and pl.cdiv(batch, rows) < 2:
        rows = max(8, ((((batch + 1) // 2) + 7) // 8) * 8)
    return rows


def cross_entropy_label_smooth(logits, targets, *, num_classes, epsilon=0.1,
                               tile_b=None):
    """logits: (B, num_classes) floats (f32 or bf16); targets: (B,) int class ids."""
    B, K = logits.shape
    assert K == num_classes
    # TODO(synk): add class-axis (K) tiling with an online log-sum-exp + weighted
    # accumulator in VMEM scratch for vocab-scale num_classes (a full f32 row
    # must currently fit in one tile).
    if tile_b is None:
        tile_b = _pick_tile_b(B, K, jnp.dtype(logits.dtype).itemsize)
    num_tiles = pl.cdiv(B, tile_b)
    targets_2d = targets.astype(jnp.int32).reshape(B, 1)

    kernel = functools.partial(
        _ce_label_smooth_kernel,
        epsilon=float(epsilon),
        num_classes=num_classes,
        batch_size=B,
    )

    partials = pl.pallas_call(
        kernel,
        out_shape=jax.ShapeDtypeStruct((num_tiles, 1), jnp.float32),
        grid=(num_tiles,),
        in_specs=[
            pl.BlockSpec((tile_b, K), lambda i: (i, 0)),   # logits tile (VMEM)
            pl.BlockSpec((tile_b, 1), lambda i: (i, 0)),   # targets tile (VMEM)
        ],
        # Per-tile scalar partial sum in SMEM — no shared accumulator, so the
        # batch axis is safe to shard across TensorCores.
        out_specs=pl.BlockSpec((1, 1), lambda i: (i, 0), memory_space=pltpu.SMEM),
        compiler_params=pltpu.CompilerParams(
            dimension_semantics=("parallel",),
            # Enough for 2x double-buffered ~4 MiB logits tiles plus a few f32
            # (TB, K) temporaries; kept <= 48 MiB so it still leaves headroom
            # inside v7x's 64 MiB physical VMEM (v5e/v6e have 128 MiB).
            vmem_limit_bytes=48 * 1024 * 1024,
        ),
    )(logits, targets_2d)

    # Divide by B exactly once, outside the kernel.
    return jnp.sum(partials) / B


def _reference(logits, targets, *, num_classes, epsilon=0.1):
    log_probs = jax.nn.log_softmax(logits.astype(jnp.float32), axis=1)
    onehot = jax.nn.one_hot(targets, num_classes, dtype=jnp.float32)
    smoothed = (1.0 - epsilon) * onehot + epsilon / num_classes
    return (-smoothed * log_probs).mean(0).sum()


if __name__ == "__main__":
    num_classes = 128
    epsilon = 0.1
    base_key = jax.random.PRNGKey(0)

    # batch=8: single aligned tile; batch=12: two tiles with a masked remainder;
    # batch=40: multi-tile split so both v7x TensorCores get work.
    for batch in (8, 12, 40):
        k1, k2 = jax.random.split(jax.random.fold_in(base_key, batch))
        logits = jax.random.normal(k1, (batch, num_classes), dtype=jnp.float32)
        targets = jax.random.randint(k2, (batch,), 0, num_classes, dtype=jnp.int32)

        loss = cross_entropy_label_smooth(
            logits, targets, num_classes=num_classes, epsilon=epsilon
        )
        loss = jax.block_until_ready(loss)

        ref = _reference(logits, targets, num_classes=num_classes, epsilon=epsilon)
        assert jnp.allclose(loss, ref, atol=1e-5, rtol=1e-5), (batch, loss, ref)

    print("KERNEL_OK")
</pallas_src>

<mosaic_0001>
module attributes {stable_mosaic.version = 11 : i64} {
  func.func @_ce_label_smooth_kernel(%arg0: i32, %arg1: memref<8x128xf32, #tpu.memory_space<vmem>>, %arg2: memref<8x1xi32, #tpu.memory_space<vmem>>, %arg3: memref<1x1xf32, #tpu.memory_space<smem>>) attributes {dimension_semantics = [#tpu.dimension_semantics<parallel>], iteration_bounds = array<i64: 1>, scalar_prefetch = 0 : i64, scratch_operands = 0 : i64, tpu.core_type = #tpu.core_type<tc>, window_params = [{transform_indices = @transform_0, window_bounds = array<i64: 8, 128>}, {transform_indices = @transform_1, window_bounds = array<i64: 8, 1>}, {transform_indices = @transform_2, window_bounds = array<i64: 1, 1>}]} {
    %c0 = arith.constant 0 : index
    %c0_0 = arith.constant 0 : index
    %0 = vector.load %arg1[%c0, %c0_0] : memref<8x128xf32, #tpu.memory_space<vmem>>, vector<8x128xf32>
    %cst = arith.constant dense<0xFF800000> : vector<8xf32>
    %1 = vector.multi_reduction <maximumf>, %0, %cst [1] : vector<8x128xf32> to vector<8xf32>
    %2 = vector.shape_cast %1 : vector<8xf32> to vector<8x1xf32>
    %3 = vector.broadcast %2 : vector<8x1xf32> to vector<8x128xf32>
    %4 = arith.subf %0, %3 : vector<8x128xf32>
    %5 = math.exp %4 : vector<8x128xf32>
    %cst_1 = arith.constant dense<0.000000e+00> : vector<8xf32>
    %6 = vector.multi_reduction <add>, %5, %cst_1 [1] : vector<8x128xf32> to vector<8xf32>
    %7 = vector.shape_cast %6 : vector<8xf32> to vector<8x1xf32>
    %8 = math.log %7 : vector<8x1xf32>
    %c0_2 = arith.constant 0 : index
    %c0_3 = arith.constant 0 : index
    %9 = vector.load %arg2[%c0_2, %c0_3] : memref<8x1xi32, #tpu.memory_space<vmem>>, vector<8x1xi32>
    %10 = tpu.iota {dimensions = array<i32: 1>} : vector<1x128xi32>
    %11 = vector.broadcast %10 : vector<1x128xi32> to vector<8x128xi32>
    %12 = vector.broadcast %9 : vector<8x1xi32> to vector<8x128xi32>
    %13 = arith.cmpi eq, %11, %12 : vector<8x128xi32>
    %cst_4 = arith.constant 0.900781273 : f32
    %cst_5 = arith.constant 7.812500e-04 : f32
    %14 = vector.broadcast %cst_4 : f32 to vector<8x128xf32>
    %15 = vector.broadcast %cst_5 : f32 to vector<8x128xf32>
    %16 = arith.select %13, %14, %15 : vector<8x128xi1>, vector<8x128xf32>
    %17 = arith.mulf %16, %0 : vector<8x128xf32>
    %cst_6 = arith.constant dense<0.000000e+00> : vector<8xf32>
    %18 = vector.multi_reduction <add>, %17, %cst_6 [1] : vector<8x128xf32> to vector<8xf32>
    %19 = vector.shape_cast %18 : vector<8xf32> to vector<8x1xf32>
    %20 = arith.addf %2, %8 : vector<8x1xf32>
    %21 = arith.subf %20, %19 : vector<8x1xf32>
    %c8_i32 = arith.constant 8 : i32
    %22 = arith.muli %arg0, %c8_i32 : i32
    %23 = tpu.iota {dimensions = array<i32: 0>} : vector<8x1xi32>
    %24 = vector.broadcast %22 : i32 to vector<8x1xi32>
    %25 = arith.addi %24, %23 : vector<8x1xi32>
    %c8_i32_7 = arith.constant 8 : i32
    %26 = vector.broadcast %c8_i32_7 : i32 to vector<8x1xi32>
    %27 = arith.cmpi slt, %25, %26 : vector<8x1xi32>
    %cst_8 = arith.constant 0.000000e+00 : f32
    %28 = vector.broadcast %cst_8 : f32 to vector<8x1xf32>
    %29 = arith.select %27, %21, %28 : vector<8x1xi1>, vector<8x1xf32>
    %30 = vector.shape_cast %29 : vector<8x1xf32> to vector<1x8x1xf32>
    %cst_9 = arith.constant dense<0.000000e+00> : vector<1xf32>
    %31 = vector.multi_reduction <add>, %30, %cst_9 [1, 2] : vector<1x8x1xf32> to vector<1xf32>
    %32 = vector.shape_cast %31 : vector<1xf32> to vector<1x1x1xf32>
    %33 = vector.extract %32[0, 0, 0] : f32 from vector<1x1x1xf32>
    %c0_10 = arith.constant 0 : index
    %c0_11 = arith.constant 0 : index
    %34 = memref.load %arg3[%c0_10, %c0_11] : memref<1x1xf32, #tpu.memory_space<smem>>
    memref.store %33, %arg3[%c0_10, %c0_11] : memref<1x1xf32, #tpu.memory_space<smem>>
    return
  }
  func.func @transform_0(%arg0: i32) -> (i32, i32) {
    %c0_i32 = arith.constant 0 : i32
    %c0_i32_0 = arith.constant 0 : i32
    return %arg0, %c0_i32 : i32, i32
  }
  func.func @transform_1(%arg0: i32) -> (i32, i32) {
    %c0_i32 = arith.constant 0 : i32
    %c0_i32_0 = arith.constant 0 : i32
    return %arg0, %c0_i32 : i32, i32
  }
  func.func @transform_2(%arg0: i32) -> (i32, i32) {
    %c0_i32 = arith.constant 0 : i32
    %c0_i32_0 = arith.constant 0 : i32
    return %arg0, %c0_i32 : i32, i32
  }
}

</mosaic_0001>

<llo_original>
// kernel: tpu_custom_call.1
$region0: #{tpu_custom_call.1}
  #allocation0 [shape = 'u32[]', space=smem, size = 0x4, offset = 0x4, fixed_abs, tag = 'smem constant byte address 0x4 - core index']
  #allocation1 [shape = 'u32[144,128]{1,0:T(1,128)}', space=vmem, size = 0x12000, scoped, tag = 'internal scratch']
  %s0 = inlined_call_operand.vmem [shape: f32[8,128], index: 0, kind: input, shape index: {}]
  %s1 = inlined_call_operand.vmem [shape: s32[8,1], index: 1, kind: input, shape index: {}]
  %s2 = inlined_call_operand.hbm [shape: f32[1,1], index: 2, kind: output, shape index: {}]
  %s3 = sld [smem:[#allocation0]]
  $region18: #{tpu_custom_call.1} parent=0
    _
  %s5 = ssub.s32 1, %s3
  %s6 = scalar_select 0, %s5, %s3
  $region1: #{tpu_custom_call.1} parent=0
    #allocation2 [shape = 'u8[512]{0}', space=smem, size = 0x200, scoped, tag = 'output window, operand 0, single buffered']
    #allocation3 [shape = 's32[1]{0}', space=sflag, size = 0x4, scoped, tag = 'scoped memory for tpu_custom_call.1']
    %7 = vsyncpa [#allocation3], 0
    // Predicated region
    $region2: #{tpu_custom_call.1} parent=1 // pred_check
      _
    $region3: #{tpu_custom_call.1} parent=1 // pred_check_branch
      %9 = sbr.rel (0) target = $region5
    $region4: #{tpu_custom_call.1} parent=1 // pred_region
      _
    $region5: #{tpu_custom_call.1} parent=1 // pred_fallthru
      _
    // Predicated region
    $region6: #{tpu_custom_call.1} parent=1 // pred_check
      _
    $region7: #{tpu_custom_call.1} parent=1 // pred_check_branch
      %11 = sbr.rel (0) target = $region9
    $region8: #{tpu_custom_call.1} parent=1 // pred_region
      _
    $region9: #{tpu_custom_call.1} parent=1 // pred_fallthru
      _
    %v12 = vld [vmem:[%s0] sm:$0xff]
    %13 = vmax.xlane.f32.xlu0 %v12
    %v14 = vpop.xlane.xlu0 %13
    %v15 = vsub.f32 %v12, %v14
    %v16 = vmul.f32 %v15, 1.442695
    %v17 = vpow.pop %v16
    %18 = vadd.xlane.f32.xlu0 %v17
    %v19 = vpop.xlane.xlu0 %18
    %v20 = vlog2.pop %v19
    %v21 = vmul.f32 %v20, 0.6931472
    %v22 = vld [vmem:[%s1] sm:$0xff]
    %v23 = vlaneseq
    %v24 = vand.u32 %v23, 127
    %25 = vset.pattern.permute.xlu0 0
    %26 = vperm.xlu0 %25, %v22
    %v27 = vpop.permute.xlu0 %26
    %vm28 = vcmp.eq.s32.totalorder %v24, %v27
    %v29 = vsel %vm28, 0.9007813, 0.00078125
    %v30 = vmul.f32 %v29, %v12
    %31 = vadd.xlane.f32.xlu0 %v30
    %v32 = vpop.xlane.xlu0 %31
    %v33 = vadd.f32 %v14, %v21
    %v34 = vsub.f32 %v33, %v32
    %s35 = smul.u32 0, 8
    %v36 = vlaneseq
    %v37 = vshrl.u32 %v36, 7
    %v38 = vstv %s35
    %v39 = vadd.s32 %v38, %v37
    %vm40 = vcmp.lt.s32.totalorder %v39, 8
    %v41 = vsel %vm40, %v34, 0.0
    %vm42 = vcmask 7168
    %v43 = vsel %vm42, %v41, 0.0
    %44 = vadd.xlane.f32.xlu0 %v43
    %v45 = vpop.xlane.xlu0 %44
    %v46 = vrot.slane %v45, 4
    %v47 = vadd.f32 %v45, %v46
    %v48 = vrot.slane %v47, 2
    %v49 = vadd.f32 %v47, %v48
    %v50 = vrot.slane %v49, 1
    %v51 = vadd.f32 %v49, %v50
    %s52 = vtos %v51
    %s53 = scalar_lea.smem [#allocation2], 0
    %54 = sst [smem:[%s53]] %s52
    // Predicated region
    $region10: #{tpu_custom_call.1} parent=1 // pred_check
      _
    $region11: #{tpu_custom_call.1} parent=1 // pred_check_branch
      %56 = sbr.rel (0) target = $region13
    $region12: #{tpu_custom_call.1} parent=1 // pred_region
      %s58 = ssub.s32 16, 16
      %59 = vsyncadd [#allocation3], %s58
      %62 = dma.smem_to_hbm [#allocation2], 16, %s2, [#allocation3]
    $region13: #{tpu_custom_call.1} parent=1 // pred_fallthru
      _
    // Predicated region
    $region14: #{tpu_custom_call.1} parent=1 // pred_check
      _
    $region15: #{tpu_custom_call.1} parent=1 // pred_check_branch
      %64 = sbr.rel (0) target = $region17
    $region16: #{tpu_custom_call.1} parent=1 // pred_region
      %65 = dma.done [#allocation3], 16
    $region17: #{tpu_custom_call.1} parent=1 // pred_fallthru
      _
    %66 = sfence
    %67 = vsyncpa [#allocation3], 1

</llo_original>
